<compile_context>
chip_gen: v7x
topology: tpu7x:2x2x1
jax: 0.10.0
libtpu: 0.0.40
codegen_flags: <defaults>
</compile_context>

<pallas_src>
import math

import jax
import jax.numpy as jnp
from jax.experimental import pallas as pl
from jax.experimental.pallas import tpu as pltpu


def _round_up(x, m):
    return (x + m - 1) // m * m


def outconv_kernel(x_ref, wc_ref, bc_ref, o_ref):
    # x_ref : (G*Cin, TL)    wc_ref: (Cout, Cin)   bc_ref: (Cout, 1)
    # o_ref : (G, Cout, TL)
    wc = wc_ref[...]                       # (Cout, Cin) f32, resident
    bc = bc_ref[...]                       # (Cout, 1)   f32
    cout, cin = wc.shape
    g_imgs = o_ref.shape[0]

    x = x_ref[...].astype(jnp.float32)     # (G*Cin, TL)

    for g in range(g_imgs):                # static unroll over images in block
        xg = x[g * cin:(g + 1) * cin, :]   # (Cin, TL)
        if cin >= 16:
            # Larger contraction: use the MXU (vector-extended slot) and keep
            # the VPU free; kernel stays memory-bound.
            acc = jnp.dot(wc, xg, preferred_element_type=jnp.float32) + bc
        else:
            # Tiny contraction: unrolled VPU broadcast-FMA chain; bias folded
            # into the first term (no materialized jnp.broadcast_to).
            acc = wc[:, 0:1] * xg[0:1, :] + bc
            for ci in range(1, cin):
                acc = acc + wc[:, ci:ci + 1] * xg[ci:ci + 1, :]
        o_ref[g] = acc.astype(o_ref.dtype)


def outconv_pallas(x_nchw, w1, b1, w2, b2, *, tl=None):
    """x_nchw: (N, Cin, H, W). w1: (16, Cin), b1: (16,), w2: (Cout, 16), b2: (Cout,)."""
    N, Cin, H, W = x_nchw.shape
    Cout = w2.shape[0]
    L = H * W
    itemsize = jnp.dtype(x_nchw.dtype).itemsize
    sub = max(8, 32 // itemsize)           # sublanes per packed row group (f32: 8)

    # Fold the two 1x1 convs (exact: there is no activation between them).
    wc = w2.astype(jnp.float32) @ w1.astype(jnp.float32)              # (Cout, Cin)
    bc = (w2.astype(jnp.float32) @ b1.astype(jnp.float32)
          + b2.astype(jnp.float32)).reshape(Cout, 1)

    # Free contiguous reshape: images' channel rows stacked on the sublane
    # axis (densifies sublanes when Cin < 8), spatial on the lane axis.
    x2 = x_nchw.reshape(N * Cin, L)

    # ---- choose images-per-block G and lane tile TL -------------------------
    # Input blocks are (G*Cin, TL): G*Cin must be sublane-aligned unless the
    # block covers the full N*Cin axis (G == N).
    g0 = sub // math.gcd(Cin, sub)
    G = N if g0 >= N else g0

    # Per-generation VMEM budget; raise the scoped limit explicitly.
    try:
        vmem_cap = int(pltpu.get_tpu_info().vmem_capacity_bytes)
    except Exception:
        vmem_cap = 64 * 1024 * 1024        # conservative (v7x per-core VMEM)
    vmem_limit = min((vmem_cap * 3) // 4, 96 * 1024 * 1024)
    budget = vmem_limit // 2               # double-buffered in+out blocks

    def _rows(g):
        # VMEM sublane rows held for one input block + one output block.
        return _round_up(g * Cin, sub) + g * _round_up(Cout, sub)

    def _tl_for(g):
        cap = budget // (2 * _rows(g) * itemsize)
        return max(128, min(_round_up(L, 128), (cap // 128) * 128))

    auto_tl = tl is None
    if auto_tl:
        tl = _tl_for(G)
        # Small spatial sizes: one lane tile already covers L, so amortize the
        # fixed per-step pipeline cost by packing more images per block.
        if tl >= _round_up(L, 128) and G < N:
            step_bytes = _rows(G) * tl * itemsize
            target = 2 * 1024 * 1024
            if step_bytes < target:
                mult = max(1, int(min(target // max(step_bytes, 1),
                                      max(N // G, 1))))
                G = N if G * mult >= N else G * mult   # stays multiple of g0
                tl = _tl_for(G)
    else:
        tl = max(128, _round_up(tl, 128))

    n_img_tiles = pl.cdiv(N, G)
    n_lane_tiles = pl.cdiv(L, tl)
    # v7x shards parallel grid axes across its 2 TensorCores: if the whole
    # problem would be one grid step, split the lane axis (harmless elsewhere).
    if auto_tl and n_img_tiles * n_lane_tiles == 1 and L >= 256:
        tl = _round_up(pl.cdiv(L, 2), 128)
        n_lane_tiles = pl.cdiv(L, tl)

    grid = (n_img_tiles, n_lane_tiles)
    gcin = G * Cin

    out = pl.pallas_call(
        outconv_kernel,
        out_shape=jax.ShapeDtypeStruct((N, Cout, L), x_nchw.dtype),
        grid_spec=pltpu.PrefetchScalarGridSpec(
            num_scalar_prefetch=0,
            grid=grid,
            in_specs=[
                pl.BlockSpec((gcin, tl), lambda n, l: (n, l)),
                pl.BlockSpec((Cout, Cin), lambda n, l: (0, 0)),
                pl.BlockSpec((Cout, 1), lambda n, l: (0, 0)),
            ],
            out_specs=pl.BlockSpec((G, Cout, tl), lambda n, l: (n, 0, l)),
        ),
        compiler_params=pltpu.CompilerParams(
            dimension_semantics=("parallel", "parallel"),
            vmem_limit_bytes=vmem_limit),
        cost_estimate=pl.CostEstimate(
            flops=2 * N * L * Cin * Cout,
            transcendentals=0,
            bytes_accessed=N * L * (Cin + Cout) * itemsize),
    )(x2, wc, bc)

    return out.reshape(N, Cout, H, W)


def outconv_ref(x_nchw, w1, b1, w2, b2):
    # Pure-JAX reference of the two 1x1 convs (unfused, channel matmuls).
    x = jnp.transpose(x_nchw, (0, 2, 3, 1)).astype(jnp.float32)      # NHWC
    h = jnp.einsum("nhwc,oc->nhwo", x, w1) + b1
    y = jnp.einsum("nhwc,oc->nhwo", h, w2) + b2
    return jnp.transpose(y, (0, 3, 1, 2)).astype(x_nchw.dtype)


if __name__ == "__main__":
    key = jax.random.PRNGKey(0)
    k_x, k_w1, k_b1, k_w2, k_b2 = jax.random.split(key, 5)

    N, Cin, H, W = 2, 4, 16, 16
    Cmid, Cout = 16, 3   # nn.Conv2d(in, 16, 1) ; nn.Conv2d(16, out, 1)

    x = jax.random.normal(k_x, (N, Cin, H, W), dtype=jnp.float32)
    # PyTorch Conv2d weight shape (out, in, 1, 1) squeezed to (out, in).
    w1 = jax.random.normal(k_w1, (Cmid, Cin), dtype=jnp.float32) * 0.1
    b1 = jax.random.normal(k_b1, (Cmid,), dtype=jnp.float32) * 0.1
    w2 = jax.random.normal(k_w2, (Cout, Cmid), dtype=jnp.float32) * 0.1
    b2 = jax.random.normal(k_b2, (Cout,), dtype=jnp.float32) * 0.1

    out = outconv_pallas(x, w1, b1, w2, b2)
    out = jax.block_until_ready(out)

    ref = outconv_ref(x, w1, b1, w2, b2)
    assert out.shape == (N, Cout, H, W), out.shape
    assert jnp.allclose(out, ref, atol=1e-5, rtol=1e-5), "mismatch vs reference"

    print("KERNEL_OK")
</pallas_src>

<mosaic_0001>
module attributes {stable_mosaic.version = 11 : i64} {
  func.func @outconv_kernel(%arg0: i32, %arg1: i32, %arg2: memref<8x128xf32, #tpu.memory_space<vmem>>, %arg3: memref<3x4xf32, #tpu.memory_space<vmem>>, %arg4: memref<3x1xf32, #tpu.memory_space<vmem>>, %arg5: memref<2x3x128xf32, #tpu.memory_space<vmem>>) attributes {dimension_semantics = [#tpu.dimension_semantics<parallel>, #tpu.dimension_semantics<parallel>], iteration_bounds = array<i64: 1, 2>, scalar_prefetch = 0 : i64, scratch_operands = 0 : i64, tpu.core_type = #tpu.core_type<tc>, window_params = [{transform_indices = @transform_0, window_bounds = array<i64: 8, 128>}, {pipeline_mode = #tpu.pipeline_mode<synchronous>, transform_indices = @transform_1, window_bounds = array<i64: 3, 4>}, {pipeline_mode = #tpu.pipeline_mode<synchronous>, transform_indices = @transform_2, window_bounds = array<i64: 3, 1>}, {transform_indices = @transform_3, window_bounds = array<i64: 2, 3, 128>}]} {
    %c0 = arith.constant 0 : index
    %c0_0 = arith.constant 0 : index
    %0 = vector.load %arg3[%c0, %c0_0] : memref<3x4xf32, #tpu.memory_space<vmem>>, vector<3x4xf32>
    %c0_1 = arith.constant 0 : index
    %c0_2 = arith.constant 0 : index
    %1 = vector.load %arg4[%c0_1, %c0_2] : memref<3x1xf32, #tpu.memory_space<vmem>>, vector<3x1xf32>
    %c0_3 = arith.constant 0 : index
    %c0_4 = arith.constant 0 : index
    %2 = vector.load %arg2[%c0_3, %c0_4] : memref<8x128xf32, #tpu.memory_space<vmem>>, vector<8x128xf32>
    %3 = vector.extract_strided_slice %2 {offsets = [0, 0], sizes = [4, 128], strides = [1, 1]} : vector<8x128xf32> to vector<4x128xf32>
    %4 = vector.extract_strided_slice %0 {offsets = [0, 0], sizes = [3, 1], strides = [1, 1]} : vector<3x4xf32> to vector<3x1xf32>
    %5 = vector.extract_strided_slice %3 {offsets = [0, 0], sizes = [1, 128], strides = [1, 1]} : vector<4x128xf32> to vector<1x128xf32>
    %6 = vector.broadcast %4 : vector<3x1xf32> to vector<3x128xf32>
    %7 = vector.broadcast %5 : vector<1x128xf32> to vector<3x128xf32>
    %8 = arith.mulf %6, %7 : vector<3x128xf32>
    %9 = vector.broadcast %1 : vector<3x1xf32> to vector<3x128xf32>
    %10 = arith.addf %8, %9 : vector<3x128xf32>
    %11 = vector.extract_strided_slice %0 {offsets = [0, 1], sizes = [3, 1], strides = [1, 1]} : vector<3x4xf32> to vector<3x1xf32>
    %12 = vector.extract_strided_slice %3 {offsets = [1, 0], sizes = [1, 128], strides = [1, 1]} : vector<4x128xf32> to vector<1x128xf32>
    %13 = vector.broadcast %11 : vector<3x1xf32> to vector<3x128xf32>
    %14 = vector.broadcast %12 : vector<1x128xf32> to vector<3x128xf32>
    %15 = arith.mulf %13, %14 : vector<3x128xf32>
    %16 = arith.addf %10, %15 : vector<3x128xf32>
    %17 = vector.extract_strided_slice %0 {offsets = [0, 2], sizes = [3, 1], strides = [1, 1]} : vector<3x4xf32> to vector<3x1xf32>
    %18 = vector.extract_strided_slice %3 {offsets = [2, 0], sizes = [1, 128], strides = [1, 1]} : vector<4x128xf32> to vector<1x128xf32>
    %19 = vector.broadcast %17 : vector<3x1xf32> to vector<3x128xf32>
    %20 = vector.broadcast %18 : vector<1x128xf32> to vector<3x128xf32>
    %21 = arith.mulf %19, %20 : vector<3x128xf32>
    %22 = arith.addf %16, %21 : vector<3x128xf32>
    %23 = vector.extract_strided_slice %0 {offsets = [0, 3], sizes = [3, 1], strides = [1, 1]} : vector<3x4xf32> to vector<3x1xf32>
    %24 = vector.extract_strided_slice %3 {offsets = [3, 0], sizes = [1, 128], strides = [1, 1]} : vector<4x128xf32> to vector<1x128xf32>
    %25 = vector.broadcast %23 : vector<3x1xf32> to vector<3x128xf32>
    %26 = vector.broadcast %24 : vector<1x128xf32> to vector<3x128xf32>
    %27 = arith.mulf %25, %26 : vector<3x128xf32>
    %28 = arith.addf %22, %27 : vector<3x128xf32>
    %c0_5 = arith.constant 0 : index
    %c0_6 = arith.constant 0 : index
    %c0_7 = arith.constant 0 : index
    %29 = vector.load %arg5[%c0_5, %c0_6, %c0_7] : memref<2x3x128xf32, #tpu.memory_space<vmem>>, vector<1x3x128xf32>
    %30 = vector.shape_cast %29 : vector<1x3x128xf32> to vector<3x128xf32>
    %31 = vector.shape_cast %28 : vector<3x128xf32> to vector<1x3x128xf32>
    tpu.vector_store %arg5[%c0_5, %c0_6, %c0_7], %31 {strides = array<i32>} : memref<2x3x128xf32, #tpu.memory_space<vmem>>, vector<1x3x128xf32>,
    %32 = vector.extract_strided_slice %2 {offsets = [4, 0], sizes = [4, 128], strides = [1, 1]} : vector<8x128xf32> to vector<4x128xf32>
    %33 = vector.extract_strided_slice %0 {offsets = [0, 0], sizes = [3, 1], strides = [1, 1]} : vector<3x4xf32> to vector<3x1xf32>
    %34 = vector.extract_strided_slice %32 {offsets = [0, 0], sizes = [1, 128], strides = [1, 1]} : vector<4x128xf32> to vector<1x128xf32>
    %35 = vector.broadcast %33 : vector<3x1xf32> to vector<3x128xf32>
    %36 = vector.broadcast %34 : vector<1x128xf32> to vector<3x128xf32>
    %37 = arith.mulf %35, %36 : vector<3x128xf32>
    %38 = vector.broadcast %1 : vector<3x1xf32> to vector<3x128xf32>
    %39 = arith.addf %37, %38 : vector<3x128xf32>
    %40 = vector.extract_strided_slice %0 {offsets = [0, 1], sizes = [3, 1], strides = [1, 1]} : vector<3x4xf32> to vector<3x1xf32>
    %41 = vector.extract_strided_slice %32 {offsets = [1, 0], sizes = [1, 128], strides = [1, 1]} : vector<4x128xf32> to vector<1x128xf32>
    %42 = vector.broadcast %40 : vector<3x1xf32> to vector<3x128xf32>
    %43 = vector.broadcast %41 : vector<1x128xf32> to vector<3x128xf32>
    %44 = arith.mulf %42, %43 : vector<3x128xf32>
    %45 = arith.addf %39, %44 : vector<3x128xf32>
    %46 = vector.extract_strided_slice %0 {offsets = [0, 2], sizes = [3, 1], strides = [1, 1]} : vector<3x4xf32> to vector<3x1xf32>
    %47 = vector.extract_strided_slice %32 {offsets = [2, 0], sizes = [1, 128], strides = [1, 1]} : vector<4x128xf32> to vector<1x128xf32>
    %48 = vector.broadcast %46 : vector<3x1xf32> to vector<3x128xf32>
    %49 = vector.broadcast %47 : vector<1x128xf32> to vector<3x128xf32>
    %50 = arith.mulf %48, %49 : vector<3x128xf32>
    %51 = arith.addf %45, %50 : vector<3x128xf32>
    %52 = vector.extract_strided_slice %0 {offsets = [0, 3], sizes = [3, 1], strides = [1, 1]} : vector<3x4xf32> to vector<3x1xf32>
    %53 = vector.extract_strided_slice %32 {offsets = [3, 0], sizes = [1, 128], strides = [1, 1]} : vector<4x128xf32> to vector<1x128xf32>
    %54 = vector.broadcast %52 : vector<3x1xf32> to vector<3x128xf32>
    %55 = vector.broadcast %53 : vector<1x128xf32> to vector<3x128xf32>
    %56 = arith.mulf %54, %55 : vector<3x128xf32>
    %57 = arith.addf %51, %56 : vector<3x128xf32>
    %c1 = arith.constant 1 : index
    %c0_8 = arith.constant 0 : index
    %c0_9 = arith.constant 0 : index
    %58 = vector.load %arg5[%c1, %c0_8, %c0_9] : memref<2x3x128xf32, #tpu.memory_space<vmem>>, vector<1x3x128xf32>
    %59 = vector.shape_cast %58 : vector<1x3x128xf32> to vector<3x128xf32>
    %60 = vector.shape_cast %57 : vector<3x128xf32> to vector<1x3x128xf32>
    tpu.vector_store %arg5[%c1, %c0_8, %c0_9], %60 {strides = array<i32>} : memref<2x3x128xf32, #tpu.memory_space<vmem>>, vector<1x3x128xf32>,
    return
  }
  func.func @transform_0(%arg0: i32, %arg1: i32) -> (i32, i32) {
    %c0_i32 = arith.constant 0 : i32
    return %arg0, %arg1 : i32, i32
  }
  func.func @transform_1(%arg0: i32, %arg1: i32) -> (i32, i32) {
    %c0_i32 = arith.constant 0 : i32
    %c0_i32_0 = arith.constant 0 : i32
    %c0_i32_1 = arith.constant 0 : i32
    return %c0_i32, %c0_i32_0 : i32, i32
  }
  func.func @transform_2(%arg0: i32, %arg1: i32) -> (i32, i32) {
    %c0_i32 = arith.constant 0 : i32
    %c0_i32_0 = arith.constant 0 : i32
    %c0_i32_1 = arith.constant 0 : i32
    return %c0_i32, %c0_i32_0 : i32, i32
  }
  func.func @transform_3(%arg0: i32, %arg1: i32) -> (i32, i32, i32) {
    %c0_i32 = arith.constant 0 : i32
    %c0_i32_0 = arith.constant 0 : i32
    return %arg0, %c0_i32, %arg1 : i32, i32, i32
  }
}

</mosaic_0001>

<llo_original>
// kernel: tpu_custom_call.1
$region0: #{tpu_custom_call.1}
  #allocation0 [shape = 'u32[]', space=smem, size = 0x4, offset = 0x4, fixed_abs, tag = 'smem constant byte address 0x4 - core index']
  #allocation1 [shape = 'u32[144,128]{1,0:T(1,128)}', space=vmem, size = 0x12000, scoped, tag = 'internal scratch']
  %s0 = inlined_call_operand.hbm [shape: f32[8,256], index: 0, kind: input, shape index: {}]
  %s1 = inlined_call_operand.vmem [shape: f32[3,4], index: 1, kind: input, shape index: {}]
  %s2 = inlined_call_operand.vmem [shape: f32[3,1], index: 2, kind: input, shape index: {}]
  %s3 = inlined_call_operand.vmem [shape: f32[2,3,256], index: 3, kind: output, shape index: {}]
  %s4 = sld [smem:[#allocation0]]
  $region86: #{tpu_custom_call.1} parent=0
    _
  %s6 = ssub.s32 1, %s4
  %s7 = scalar_select 0, %s6, %s4
  $region1: #{tpu_custom_call.1} parent=0
    #allocation2 [shape = 'u8[8192]{0}', space=vmem, size = 0x2000, scoped, tag = 'input window, operand 0']
    #allocation3 [shape = 's32[2]{0}', space=sflag, size = 0x8, scoped, tag = 'scoped memory for tpu_custom_call.1']
    #allocation4 [shape = 'u8[8192]{0}', space=vmem, size = 0x2000, scoped, tag = 'output window, operand 0']
    %8 = vsyncpa [#allocation3], 0
    %s9 = scalar_lea.sflag [#allocation3], 1
    %10 = vsyncpa %s9, 0
    loop: start=0, step=1, limit=4
    $region2: #{tpu_custom_call.1} parent=1 // loop_pre_header
      _
    $region3: #{tpu_custom_call.1} parent=1 // loop_header
      %s12 = sphi 0, %s16
      %p13 = scmp.ge.s32.totalorder %s12, 4
      %s19 = sphi 0, %s31
      %s20 = sphi 0, %s27
      %s21 = sphi 0, %s19
      %s22 = sphi 0, %s20
      %s23 = sphi 0, %s21
      %s24 = sphi 0, %s22
      %s36 = sphi 0, %s38
      %s39 = sphi 0, %s36
      %s40 = sphi 0, %s39
      %s56 = sphi 0, %s40
      %s60 = sphi 0, %s60
      %s62 = sphi 0, %s60
      %s63 = sphi 0, %s62
      %s77 = sphi 0, %s63
      %s81 = sphi 0, %s81
      %s83 = sphi 0, %s81
      %s84 = sphi 0, %s83
      %s98 = sphi 0, %s84
      %s106 = sphi 0, %s108
      %s109 = sphi 0, %s106
      %s110 = sphi 0, %s109
      %s126 = sphi 0, %s110
    $region4: #{tpu_custom_call.1} parent=1 // loop_header_branch
      %15 = sbr.rel (%p13) target = $region8
    $region5: #{tpu_custom_call.1} parent=1 // loop_body
      %s17 = ssub.s32 %s12, 1
      %s18 = ssub.s32 %s12, 2
      %s25 = sadd.s32 1, %s20
      %p26 = scmp.ge.s32.totalorder %s25, 2
      %s27 = scalar_select %p26, 0, %s25
      %s28 = sadd.s32 1, %s19
      %s29 = scalar_select %p26, %s28, %s19
      %p30 = scmp.ge.s32.totalorder %s29, 1
      %s31 = scalar_select %p30, 0, %s29
      %s32 = ssub.s32 %s19, %s31
      %s33 = ssub.s32 %s20, %s27
      %s34 = sor.u32 %s32, %s33
      %p35 = scmp.eq.s32.totalorder %s34, 0
      %s37 = sadd.s32 %s36, 1
      %s38 = scalar_select %p35, %s36, %s37
      %p41 = pneg %p35
      %p42 = scmp.eq.s32.totalorder %s12, 1
      %p43 = por %p41, %p42
      %p44 = scmp.ne.s32.totalorder %s36, %s39
      %p45 = scmp.eq.s32.totalorder %s12, 0
      %p46 = por %p44, %p45
      %p47 = scmp.ne.s32.totalorder %s36, %s39
      %p48 = scmp.eq.s32.totalorder %s17, 1
      %p49 = por %p47, %p48
      %p50 = scmp.ne.s32.totalorder %s39, %s40
      %p51 = scmp.eq.s32.totalorder %s17, 0
      %p52 = por %p50, %p51
      %p53 = scmp.ne.s32.totalorder %s39, %s40
      %p54 = scmp.eq.s32.totalorder %s18, 1
      %p55 = por %p53, %p54
      %p57 = scmp.ne.s32.totalorder %s40, %s56
      %p58 = scmp.eq.s32.totalorder %s18, 0
      %p59 = por %p57, %p58
      %s61 = sadd.s32 %s60, 1
      %p64 = scmp.eq.s32.totalorder %s12, 1
      %p65 = scmp.ne.s32.totalorder %s60, %s62
      %p66 = scmp.eq.s32.totalorder %s12, 0
      %p67 = por %p65, %p66
      %p68 = scmp.ne.s32.totalorder %s60, %s62
      %p69 = scmp.eq.s32.totalorder %s17, 1
      %p70 = por %p68, %p69
      %p71 = scmp.ne.s32.totalorder %s62, %s63
      %p72 = scmp.eq.s32.totalorder %s17, 0
      %p73 = por %p71, %p72
      %p74 = scmp.ne.s32.totalorder %s62, %s63
      %p75 = scmp.eq.s32.totalorder %s18, 1
      %p76 = por %p74, %p75
      %p78 = scmp.ne.s32.totalorder %s63, %s77
      %p79 = scmp.eq.s32.totalorder %s18, 0
      %p80 = por %p78, %p79
      %s82 = sadd.s32 %s81, 1
      %p85 = scmp.eq.s32.totalorder %s12, 1
      %p86 = scmp.ne.s32.totalorder %s81, %s83
      %p87 = scmp.eq.s32.totalorder %s12, 0
      %p88 = por %p86, %p87
      %p89 = scmp.ne.s32.totalorder %s81, %s83
      %p90 = scmp.eq.s32.totalorder %s17, 1
      %p91 = por %p89, %p90
      %p92 = scmp.ne.s32.totalorder %s83, %s84
      %p93 = scmp.eq.s32.totalorder %s17, 0
      %p94 = por %p92, %p93
      %p95 = scmp.ne.s32.totalorder %s83, %s84
      %p96 = scmp.eq.s32.totalorder %s18, 1
      %p97 = por %p95, %p96
      %p99 = scmp.ne.s32.totalorder %s84, %s98
      %p100 = scmp.eq.s32.totalorder %s18, 0
      %p101 = por %p99, %p100
      %s102 = ssub.s32 %s19, %s31
      %s103 = ssub.s32 %s20, %s27
      %s104 = sor.u32 %s102, %s103
      %p105 = scmp.eq.s32.totalorder %s104, 0
      %s107 = sadd.s32 %s106, 1
      %s108 = scalar_select %p105, %s106, %s107
      %p111 = pneg %p105
      %p112 = scmp.eq.s32.totalorder %s12, 1
      %p113 = por %p111, %p112
      %p114 = scmp.ne.s32.totalorder %s106, %s109
      %p115 = scmp.eq.s32.totalorder %s12, 0
      %p116 = por %p114, %p115
      %p117 = scmp.ne.s32.totalorder %s106, %s109
      %p118 = scmp.eq.s32.totalorder %s17, 1
      %p119 = por %p117, %p118
      %p120 = scmp.ne.s32.totalorder %s109, %s110
      %p121 = scmp.eq.s32.totalorder %s17, 0
      %p122 = por %p120, %p121
      %p123 = scmp.ne.s32.totalorder %s109, %s110
      %p124 = scmp.eq.s32.totalorder %s18, 1
      %p125 = por %p123, %p124
      %p127 = scmp.ne.s32.totalorder %s110, %s126
      %p128 = scmp.eq.s32.totalorder %s18, 0
      %p129 = por %p127, %p128
      %p130 = scmp.le.s32.totalorder 1, %s12
      %p131 = scmp.lt.s32.totalorder %s12, 3
      %p132 = pnand %p130, %p131
      %p133 = pneg %p132
      // Predicated region
      $region9: #{tpu_custom_call.1} parent=5 // pred_check
        _
      $region10: #{tpu_custom_call.1} parent=5 // pred_check_branch
        %135 = sbr.rel (%p132) target = $region12
      $region11: #{tpu_custom_call.1} parent=5 // pred_region
        %s136 = ssub.s32 %s12, 1
        // Predicated region
        $region13: #{tpu_custom_call.1} parent=11 // pred_check
          %p137 = pneg %p73
        $region14: #{tpu_custom_call.1} parent=11 // pred_check_branch
          %139 = sbr.rel (%p137) target = $region16
        $region15: #{tpu_custom_call.1} parent=11 // pred_region
          _
        $region16: #{tpu_custom_call.1} parent=11 // pred_fallthru
          _
        // Predicated region
        $region17: #{tpu_custom_call.1} parent=11 // pred_check
          %p140 = pneg %p94
        $region18: #{tpu_custom_call.1} parent=11 // pred_check_branch
          %142 = sbr.rel (%p140) target = $region20
        $region19: #{tpu_custom_call.1} parent=11 // pred_region
          _
        $region20: #{tpu_custom_call.1} parent=11 // pred_fallthru
          _
      $region12: #{tpu_custom_call.1} parent=5 // pred_fallthru
        _
      %p143 = scmp.lt.s32.totalorder %s12, 2
      // Predicated region
      $region21: #{tpu_custom_call.1} parent=5 // pred_check
        %p144 = pneg %p143
      $region22: #{tpu_custom_call.1} parent=5 // pred_check_branch
        %146 = sbr.rel (%p144) target = $region24
      $region23: #{tpu_custom_call.1} parent=5 // pred_region
        // Predicated region
        $region25: #{tpu_custom_call.1} parent=23 // pred_check
          %p147 = pneg %p46
        $region26: #{tpu_custom_call.1} parent=23 // pred_check_branch
          %149 = sbr.rel (%p147) target = $region28
        $region27: #{tpu_custom_call.1} parent=23 // pred_region
          %s150 = sand.u32 %s36, 1
          %s151 = scalar_lea.sflag [#allocation3], %s150
          %s152 = sand.u32 %s36, 1
          %s153 = smul.addr %s152, 8
          %s154 = scalar_lea.vmem [#allocation2], %s153
          %s156 = ssub.s32 128, 128
          %157 = vsyncadd %s151, %s156
          %s158 = smul.addr %s19, 2
          %s159 = sadd.s32 %s20, %s158
          %s160 = smul.addr %s159, 128
          %s161 = scalar_lea.hbm %s0, %s160
          %s163 = sshll.u32 %s154, 4
          %s164 = int_to_ptr.vmem [resolvable:$true] %s163
          %166 = dma.hbm_to_vmem [thread:$0]  %s161, 128, %s164, %s151
        $region28: #{tpu_custom_call.1} parent=23 // pred_fallthru
          _
      $region24: #{tpu_custom_call.1} parent=5 // pred_fallthru
        _
      %p167 = scmp.le.s32.totalorder 1, %s12
      %p168 = scmp.lt.s32.totalorder %s12, 3
      %p169 = pnand %p167, %p168
      %p170 = pneg %p169
      // Predicated region
      $region29: #{tpu_custom_call.1} parent=5 // pred_check
        _
      $region30: #{tpu_custom_call.1} parent=5 // pred_check_branch
        %172 = sbr.rel (%p169) target = $region32
      $region31: #{tpu_custom_call.1} parent=5 // pred_region
        %s173 = ssub.s32 %s12, 1
        %s174 = sand.u32 %s39, 1
        %s175 = scalar_lea.sflag [#allocation3], %s174
        %s176 = sand.u32 %s39, 1
        %s177 = smul.addr %s176, 8
        %s178 = scalar_lea.vmem [#allocation2], %s177
        // Predicated region
        $region33: #{tpu_custom_call.1} parent=31 // pred_check
          %p179 = pneg %p52
        $region34: #{tpu_custom_call.1} parent=31 // pred_check_branch
          %181 = sbr.rel (%p179) target = $region36
        $region35: #{tpu_custom_call.1} parent=31 // pred_region
          %182 = dma.done %s175, 128
        $region36: #{tpu_custom_call.1} parent=31 // pred_fallthru
          _
        %s183 = sand.u32 %s39, 1
        %s184 = scalar_lea.sflag [#allocation3], %s183
        %s185 = sand.u32 %s39, 1
        %s186 = smul.addr %s185, 8
        %s187 = scalar_lea.vmem [#allocation2], %s186
        %p188 = pneg %p52
        %p189 = pneg %p49
        %p190 = pneg %p73
        %p191 = pneg %p70
        %p192 = pneg %p94
        %p193 = pneg %p91
        %p194 = pneg %p122
        %p195 = pneg %p119
        %s196 = sand.u32 %s109, 1
        %s197 = sand.u32 %s109, 1
        %s198 = smul.addr %s197, 8
        %s199 = scalar_lea.vmem [#allocation4], %s198
        %s200 = smul.u32 2, %s21
        %v201 = vld [vmem:[%s1] sm:$0x7]
        %v202 = vld [vmem:[%s2] sm:$0x7]
        %v203 = vld [vmem:[%s178] sm:$0xff]
        %205 = vset.pattern.permute.xlu0 0
        %206 = vperm.xlu0 %205, %v201
        %v207 = vpop.permute.xlu0 %206
        %v209 = vlaneseq
        %v210 = vshrl.u32 %v209, 7
        %v211 = vsub.s32 0, %v210
        %v212 = vrot.slane %v203, %v211
        %v213 = vmul.f32 %v207, %v212
        %215 = vset.pattern.permute.xlu0 0
        %216 = vperm.xlu0 %215, %v202
        %v217 = vpop.permute.xlu0 %216
        %v219 = vadd.f32 %v213, %v217
        %220 = vset.pattern.permute.xlu0 1
        %221 = vperm.xlu0 %220, %v201
        %v222 = vpop.permute.xlu0 %221
        %v224 = vlaneseq
        %v225 = vshrl.u32 %v224, 7
        %v226 = vsub.s32 1, %v225
        %v227 = vrot.slane %v203, %v226
        %v228 = vmul.f32 %v222, %v227
        %v229 = vadd.f32 %v219, %v228
        %230 = vset.pattern.permute.xlu0 2
        %231 = vperm.xlu0 %230, %v201
        %v232 = vpop.permute.xlu0 %231
        %v234 = vlaneseq
        %v235 = vshrl.u32 %v234, 7
        %v236 = vsub.s32 2, %v235
        %v237 = vrot.slane %v203, %v236
        %v238 = vmul.f32 %v232, %v237
        %v239 = vadd.f32 %v229, %v238
        %240 = vset.pattern.permute.xlu0 3
        %241 = vperm.xlu0 %240, %v201
        %v242 = vpop.permute.xlu0 %241
        %v244 = vlaneseq
        %v245 = vshrl.u32 %v244, 7
        %v246 = vsub.s32 3, %v245
        %v247 = vrot.slane %v203, %v246
        %v248 = vmul.f32 %v242, %v247
        %v249 = vadd.f32 %v239, %v248
        %250 = vst [vmem:[%s199] sm:$0x7] %v249
        %v251 = vlaneseq
        %v252 = vshrl.u32 %v251, 7
        %v253 = vsub.s32 4, %v252
        %v254 = vrot.slane %v203, %v253
        %v255 = vmul.f32 %v207, %v254
        %v256 = vadd.f32 %v255, %v217
        %v257 = vlaneseq
        %v258 = vshrl.u32 %v257, 7
        %v259 = vsub.s32 5, %v258
        %v260 = vrot.slane %v203, %v259
        %v261 = vmul.f32 %v222, %v260
        %v262 = vadd.f32 %v256, %v261
        %v263 = vlaneseq
        %v264 = vshrl.u32 %v263, 7
        %v265 = vsub.s32 6, %v264
        %v266 = vrot.slane %v203, %v265
        %v267 = vmul.f32 %v232, %v266
        %v268 = vadd.f32 %v262, %v267
        %v269 = vlaneseq
        %v270 = vshrl.u32 %v269, 7
        %v271 = vsub.s32 7, %v270
        %v272 = vrot.slane %v203, %v271
        %v273 = vmul.f32 %v242, %v272
        %v274 = vadd.f32 %v268, %v273
        %s275 = scalar_lea.vmem %s199, 4 [#allocation4]
        %276 = vst [vmem:[%s275] sm:$0x7] %v274
        %s277 = sand.u32 %s109, 1
        %s278 = sand.u32 %s109, 1
        %s279 = smul.addr %s278, 8
        %s280 = scalar_lea.vmem [#allocation4], %s279
        // Predicated region
        $region37: #{tpu_custom_call.1} parent=31 // pred_check
          %p281 = pneg %p119
        $region38: #{tpu_custom_call.1} parent=31 // pred_check_branch
          %283 = sbr.rel (%p281) target = $region40
        $region39: #{tpu_custom_call.1} parent=31 // pred_region
          %s284 = smul.u32 2, %s21
          %s285 = smul.addr %s284, 2
          %s286 = sadd.s32 %s22, %s285
          %s287 = smul.addr %s286, 4
          %s288 = scalar_lea.vmem %s3, %s287
          // Predicated region
          $region41: #{tpu_custom_call.1} parent=39 // pred_check
            _
          $region42: #{tpu_custom_call.1} parent=39 // pred_check_branch
            %290 = sbr.rel (0) target = $region44
          $region43: #{tpu_custom_call.1} parent=39 // pred_region
            // Predicated region
            $region45: #{tpu_custom_call.1} parent=43 // pred_check
              _
            $region46: #{tpu_custom_call.1} parent=43 // pred_check_branch
              %292 = sbr.rel target = $region48
            $region47: #{tpu_custom_call.1} parent=43 // pred_region
              // Predicated region
              $region60: #{tpu_custom_call.1} parent=47 // pred_check
                _
              $region61: #{tpu_custom_call.1} parent=47 // pred_check_branch
                %309 = sbr.rel (0) target = $region63
              $region62: #{tpu_custom_call.1} parent=47 // pred_region
                loop: start=0, step=1, limit=1
                $region64: #{tpu_custom_call.1} parent=62 // loop_pre_header
                  _
                $region65: #{tpu_custom_call.1} parent=62 // loop_header
                  %s311 = sphi 0, %s315
                  %p312 = scmp.ge.s32.totalorder %s311, 1
                  %s316 = sphi %s280, %s280
                  %s317 = sphi %s288, %s288
                $region66: #{tpu_custom_call.1} parent=62 // loop_header_branch
                  %314 = sbr.rel (%p312) target = $region70
                $region67: #{tpu_custom_call.1} parent=62 // loop_body
                  _
                $region68: #{tpu_custom_call.1} parent=62 // loop_footer
                  %s315 = sadd.s32 1, %s311
                $region69: #{tpu_custom_call.1} parent=62 // loop_footer_branch
                  %310 = sbr.rel target = $region65
                $region70: #{tpu_custom_call.1} parent=62 // loop_exit
                  _
                loop: start=0, step=1, limit=1
                $region71: #{tpu_custom_call.1} parent=62 // loop_pre_header
                  _
                $region72: #{tpu_custom_call.1} parent=62 // loop_header
                  %s320 = sphi 0, %s324
                  %p321 = scmp.ge.s32.totalorder %s320, 1
                  %s325 = sphi %s280, %s280
                  %s326 = sphi %s288, %s288
                $region73: #{tpu_custom_call.1} parent=62 // loop_header_branch
                  %323 = sbr.rel (%p321) target = $region77
                $region74: #{tpu_custom_call.1} parent=62 // loop_body
                  %v327 = vld [vmem:[%s325] sm:$0xf]
                  %328 = vst [vmem:[%s326] sm:$0xf] %v327
                  %v329 = vld [vmem:[%s325 + $0x4] sm:$0xf]
                  %330 = vst [vmem:[%s326 + $0x8] sm:$0xf] %v329
                $region75: #{tpu_custom_call.1} parent=62 // loop_footer
                  %s324 = sadd.s32 1, %s320
                $region76: #{tpu_custom_call.1} parent=62 // loop_footer_branch
                  %319 = sbr.rel target = $region72
                $region77: #{tpu_custom_call.1} parent=62 // loop_exit
                  _
              $region63: #{tpu_custom_call.1} parent=47 // pred_fallthru
                _
            $region48: #{tpu_custom_call.1} parent=43 // pred_fallthru
              _
            // Predicated region
            $region49: #{tpu_custom_call.1} parent=43 // pred_check
              _
            $region50: #{tpu_custom_call.1} parent=43 // pred_check_branch
              %294 = sbr.rel (0) target = $region52
            $region51: #{tpu_custom_call.1} parent=43 // pred_region
              loop: start=0, step=1, limit=1
              $region53: #{tpu_custom_call.1} parent=51 // loop_pre_header
                _
              $region54: #{tpu_custom_call.1} parent=51 // loop_header
                %s297 = sphi 0, %s301
                %p298 = scmp.ge.s32.totalorder %s297, 1
                %s302 = sphi %s280, %s280
                %s303 = sphi %s288, %s288
              $region55: #{tpu_custom_call.1} parent=51 // loop_header_branch
                %300 = sbr.rel (%p298) target = $region59
              $region56: #{tpu_custom_call.1} parent=51 // loop_body
                %v304 = vld [vmem:[%s302] sm:$0xf]
                %305 = vst [vmem:[%s303] sm:$0xf] %v304
                %v306 = vld [vmem:[%s302 + $0x4] sm:$0xf]
                %307 = vst [vmem:[%s303 + $0x8] sm:$0xf] %v306
              $region57: #{tpu_custom_call.1} parent=51 // loop_footer
                %s301 = sadd.s32 1, %s297
              $region58: #{tpu_custom_call.1} parent=51 // loop_footer_branch
                %296 = sbr.rel target = $region54
              $region59: #{tpu_custom_call.1} parent=51 // loop_exit
                _
            $region52: #{tpu_custom_call.1} parent=43 // pred_fallthru
              _
          $region44: #{tpu_custom_call.1} parent=39 // pred_fallthru
            _
          %331 = vnop
        $region40: #{tpu_custom_call.1} parent=31 // pred_fallthru
          _
      $region32: #{tpu_custom_call.1} parent=5 // pred_fallthru
        _
      %p332 = scmp.le.s32.totalorder 2, %s12
      // Predicated region
      $region78: #{tpu_custom_call.1} parent=5 // pred_check
        %p333 = pneg %p332
      $region79: #{tpu_custom_call.1} parent=5 // pred_check_branch
        %335 = sbr.rel (%p333) target = $region81
      $region80: #{tpu_custom_call.1} parent=5 // pred_region
        %s336 = ssub.s32 %s12, 2
        // Predicated region
        $region82: #{tpu_custom_call.1} parent=80 // pred_check
          %p337 = pneg %p125
        $region83: #{tpu_custom_call.1} parent=80 // pred_check_branch
          %339 = sbr.rel (%p337) target = $region85
        $region84: #{tpu_custom_call.1} parent=80 // pred_region
          %s340 = sand.u32 %s110, 1
          %s341 = sand.u32 %s110, 1
          %s342 = smul.addr %s341, 8
          %s343 = scalar_lea.vmem [#allocation4], %s342
        $region85: #{tpu_custom_call.1} parent=80 // pred_fallthru
          _
      $region81: #{tpu_custom_call.1} parent=5 // pred_fallthru
        _
    $region6: #{tpu_custom_call.1} parent=1 // loop_footer
      %s16 = sadd.s32 1, %s12
    $region7: #{tpu_custom_call.1} parent=1 // loop_footer_branch
      %11 = sbr.rel target = $region3
    $region8: #{tpu_custom_call.1} parent=1 // loop_exit
      _
    %344 = vsyncpa [#allocation3], 1
    %s345 = scalar_lea.sflag [#allocation3], 1
    %346 = vsyncpa %s345, 1

</llo_original>
